<compile_context>
chip_gen: v7x
topology: tpu7x:2x2x1
jax: 0.10.0
libtpu: 0.0.40
codegen_flags: <defaults>
</compile_context>

<pallas_src>
import jax
import jax.numpy as jnp
from jax import lax
from jax.experimental import pallas as pl
from jax.experimental.pallas import tpu as pltpu


# ----------------------------------------------------------------------------
# Kernel
# ----------------------------------------------------------------------------
def _mask_kernel(params_ref, x_ref, o_ref):
    """Zero-fill the time-mask and freq-mask rectangles for a (Bb, F, Tt) block.

    params_ref: SMEM int32, shape (4*B,), laid out [t_pos | t_len | f_pos | f_len].
    x_ref, o_ref: VMEM, shape (Bb, F, Tt).
    """
    Bb, F, Tt = x_ref.shape
    B = params_ref.shape[0] // 4

    b0 = pl.program_id(0) * Bb          # first batch row of this block
    t0 = pl.program_id(1) * Tt          # global time offset of this block

    # 1-D iotas; the compares/OR broadcast them, so no (F, Tt) index tensors.
    t_idx = t0 + lax.broadcasted_iota(jnp.int32, (1, Tt), 1)   # (1, Tt)
    f_idx = lax.broadcasted_iota(jnp.int32, (F, 1), 0)         # (F, 1)
    zero = jnp.zeros((), x_ref.dtype)

    def body(i, carry):
        b = b0 + i
        t_pos = params_ref[b]
        t_len = params_ref[B + b]
        f_pos = params_ref[2 * B + b]
        f_len = params_ref[3 * B + b]
        time_mask = (t_idx >= t_pos) & (t_idx < t_pos + t_len)   # (1, Tt)
        freq_mask = (f_idx >= f_pos) & (f_idx < f_pos + f_len)   # (F, 1)
        o_ref[i] = jnp.where(time_mask | freq_mask, zero, x_ref[i])
        return carry

    lax.fori_loop(0, Bb, body, 0, unroll=True)


# ----------------------------------------------------------------------------
# Tiling choice
# ----------------------------------------------------------------------------
def _pick_tiles(B, F, T, itemsize, max_block_bytes=2 * 1024 * 1024, max_unroll=16):
    """Choose (batch_block, time_block): big lane-dense blocks, VMEM-safe on v7x."""
    row_bytes = F * T * itemsize
    if row_bytes <= max_block_bytes:
        divisors = [d for d in range(1, B + 1)
                    if B % d == 0 and d <= max_unroll
                    and d * row_bytes <= max_block_bytes]
        # Prefer keeping >= 2 grid steps so megacore / v7x's 2 TCs both get work.
        multi = [d for d in divisors if B // d >= 2]
        bb = max(multi or divisors or [1])
        return bb, T
    # Very long time axis: one row per block, lane-dense (multiple of 128) tile.
    tt = max(128, (max_block_bytes // (F * itemsize)) // 128 * 128)
    if tt >= T:
        return 1, T
    return 1, tt


# ----------------------------------------------------------------------------
# pallas_call wrapper
# ----------------------------------------------------------------------------
def fbank_aug_pallas(x, params):
    """x: (B, F, T) float array.  params: (4*B,) int32 = [t_pos|t_len|f_pos|f_len]."""
    B, F, T = x.shape
    Bb, Tt = _pick_tiles(B, F, T, jnp.dtype(x.dtype).itemsize)
    grid = (B // Bb, pl.cdiv(T, Tt))

    return pl.pallas_call(
        _mask_kernel,
        out_shape=jax.ShapeDtypeStruct((B, F, T), x.dtype),
        grid_spec=pltpu.PrefetchScalarGridSpec(
            num_scalar_prefetch=1,
            grid=grid,
            in_specs=[pl.BlockSpec((Bb, F, Tt), lambda bi, ti, params: (bi, 0, ti))],
            out_specs=pl.BlockSpec((Bb, F, Tt), lambda bi, ti, params: (bi, 0, ti)),
        ),
        compiler_params=pltpu.CompilerParams(
            dimension_semantics=("parallel", "parallel")),
    )(params, x)


# ----------------------------------------------------------------------------
# Randomness (mirrors torch.randint semantics of the module) + public API
# ----------------------------------------------------------------------------
def _randint_dynamic(key, shape, low, high):
    """Integer uniform in [low, high) where `high` is a traced value.

    torch.randint's upper bound depends on mask_len.max() (data-dependent); we
    emulate it with a float uniform scaled to the span, which avoids the
    modulo-fold bias of the previous version.
    """
    span = jnp.maximum(high - low, 1).astype(jnp.float32)
    u = jax.random.uniform(key, shape, dtype=jnp.float32)
    pos = low + jnp.floor(u * span).astype(jnp.int32)
    return jnp.minimum(pos, (low + span - 1).astype(jnp.int32))


def sample_mask_params(key, B, F, T,
                       freq_mask_width=(0, 8),
                       time_mask_width=(0, 10),
                       freq_start_bin=0):
    """Per-batch [t_pos, t_len, f_pos, f_len] flattened to (4*B,) int32.

    Note: the PyTorch module uses `freq_start_bin` as the lower bound of
    mask_pos for BOTH axes (mask_along_axis is shared); we match that exactly.
    """
    k_tl, k_tp, k_fl, k_fp = jax.random.split(key, 4)

    # dim=2 (time) mask
    t_len = jax.random.randint(k_tl, (B,), time_mask_width[0], time_mask_width[1],
                               dtype=jnp.int32)
    t_high = jnp.maximum(1, T - jnp.max(t_len))
    t_pos = _randint_dynamic(k_tp, (B,), freq_start_bin, t_high)

    # dim=1 (freq) mask
    f_len = jax.random.randint(k_fl, (B,), freq_mask_width[0], freq_mask_width[1],
                               dtype=jnp.int32)
    f_high = jnp.maximum(1, F - jnp.max(f_len))
    f_pos = _randint_dynamic(k_fp, (B,), freq_start_bin, f_high)

    return jnp.concatenate([t_pos, t_len, f_pos, f_len]).astype(jnp.int32)


def fbank_aug(x, key,
              freq_mask_width=(0, 8),
              time_mask_width=(0, 10),
              freq_start_bin=0):
    """Replicates FbankAug.forward: time masking (dim=2) then freq masking (dim=1)."""
    B, F, T = x.shape
    params = sample_mask_params(key, B, F, T, freq_mask_width, time_mask_width,
                                freq_start_bin)
    return fbank_aug_pallas(x, params)


# ----------------------------------------------------------------------------
# Demo / correctness check
# ----------------------------------------------------------------------------
if __name__ == "__main__":
    key = jax.random.PRNGKey(0)
    k_x, k_aug = jax.random.split(key)

    B, F, T = 4, 16, 128   # (batch, fea, time); T lane-dense multiple of 128
    x = jax.random.normal(k_x, (B, F, T), dtype=jnp.float32)

    params = sample_mask_params(k_aug, B, F, T)
    y = jax.block_until_ready(fbank_aug_pallas(x, params))

    # Pure-JAX reference using the same sampled params.
    t_pos = params[0 * B:1 * B].reshape(B, 1, 1)
    t_len = params[1 * B:2 * B].reshape(B, 1, 1)
    f_pos = params[2 * B:3 * B].reshape(B, 1, 1)
    f_len = params[3 * B:4 * B].reshape(B, 1, 1)
    t_ar = jnp.arange(T, dtype=jnp.int32).reshape(1, 1, T)
    f_ar = jnp.arange(F, dtype=jnp.int32).reshape(1, F, 1)
    time_mask = (t_ar >= t_pos) & (t_ar < t_pos + t_len)
    freq_mask = (f_ar >= f_pos) & (f_ar < f_pos + f_len)
    ref = jnp.where(time_mask | freq_mask, jnp.float32(0.0), x)

    assert y.shape == x.shape and y.dtype == x.dtype
    assert bool(jnp.array_equal(y, ref))
    assert bool(jnp.all(jnp.logical_or(y == x, y == 0.0)))

    print("KERNEL_OK")
</pallas_src>

<mosaic_0001>
module attributes {stable_mosaic.version = 11 : i64} {
  func.func @_mask_kernel(%arg0: i32, %arg1: i32, %arg2: memref<16xi32, #tpu.memory_space<smem>>, %arg3: memref<2x16x128xf32, #tpu.memory_space<vmem>>, %arg4: memref<2x16x128xf32, #tpu.memory_space<vmem>>) attributes {dimension_semantics = [#tpu.dimension_semantics<parallel>, #tpu.dimension_semantics<parallel>], iteration_bounds = array<i64: 2, 1>, scalar_prefetch = 1 : i64, scratch_operands = 0 : i64, tpu.core_type = #tpu.core_type<tc>, window_params = [{transform_indices = @transform_0, window_bounds = array<i64: 2, 16, 128>}, {transform_indices = @transform_1, window_bounds = array<i64: 2, 16, 128>}]} {
    %c2_i32 = arith.constant 2 : i32
    %0 = arith.muli %arg0, %c2_i32 : i32
    %c128_i32 = arith.constant 128 : i32
    %1 = arith.muli %arg1, %c128_i32 : i32
    %2 = tpu.iota {dimensions = array<i32: 1>} : vector<1x128xi32>
    %3 = vector.broadcast %1 : i32 to vector<1x128xi32>
    %4 = arith.addi %3, %2 : vector<1x128xi32>
    %5 = tpu.iota {dimensions = array<i32: 0>} : vector<16x1xi32>
    %cst = arith.constant 0.000000e+00 : f32
    %c0_i32 = arith.constant 0 : i32
    %6 = arith.addi %0, %c0_i32 : i32
    %7 = arith.index_cast %6 : i32 to index
    %8 = memref.load %arg2[%7] : memref<16xi32, #tpu.memory_space<smem>>
    %c4_i32 = arith.constant 4 : i32
    %9 = arith.addi %c4_i32, %6 : i32
    %10 = arith.index_cast %9 : i32 to index
    %11 = memref.load %arg2[%10] : memref<16xi32, #tpu.memory_space<smem>>
    %c8_i32 = arith.constant 8 : i32
    %12 = arith.addi %c8_i32, %6 : i32
    %13 = arith.index_cast %12 : i32 to index
    %14 = memref.load %arg2[%13] : memref<16xi32, #tpu.memory_space<smem>>
    %c12_i32 = arith.constant 12 : i32
    %15 = arith.addi %c12_i32, %6 : i32
    %16 = arith.index_cast %15 : i32 to index
    %17 = memref.load %arg2[%16] : memref<16xi32, #tpu.memory_space<smem>>
    %18 = vector.broadcast %8 : i32 to vector<1x128xi32>
    %19 = arith.cmpi sge, %4, %18 : vector<1x128xi32>
    %20 = arith.addi %8, %11 : i32
    %21 = vector.broadcast %20 : i32 to vector<1x128xi32>
    %22 = arith.cmpi slt, %4, %21 : vector<1x128xi32>
    %23 = arith.andi %19, %22 : vector<1x128xi1>
    %24 = vector.broadcast %14 : i32 to vector<16x1xi32>
    %25 = arith.cmpi sge, %5, %24 : vector<16x1xi32>
    %26 = arith.addi %14, %17 : i32
    %27 = vector.broadcast %26 : i32 to vector<16x1xi32>
    %28 = arith.cmpi slt, %5, %27 : vector<16x1xi32>
    %29 = arith.andi %25, %28 : vector<16x1xi1>
    %30 = vector.broadcast %23 : vector<1x128xi1> to vector<16x128xi1>
    %31 = vector.broadcast %29 : vector<16x1xi1> to vector<16x128xi1>
    %32 = arith.ori %30, %31 : vector<16x128xi1>
    %33 = arith.index_cast %c0_i32 : i32 to index
    %c0 = arith.constant 0 : index
    %c0_0 = arith.constant 0 : index
    %34 = vector.load %arg3[%33, %c0, %c0_0] : memref<2x16x128xf32, #tpu.memory_space<vmem>>, vector<1x16x128xf32>
    %35 = vector.shape_cast %34 : vector<1x16x128xf32> to vector<16x128xf32>
    %36 = vector.broadcast %cst : f32 to vector<16x128xf32>
    %37 = arith.select %32, %36, %35 : vector<16x128xi1>, vector<16x128xf32>
    %38 = arith.index_cast %c0_i32 : i32 to index
    %c0_1 = arith.constant 0 : index
    %c0_2 = arith.constant 0 : index
    %39 = vector.load %arg4[%38, %c0_1, %c0_2] : memref<2x16x128xf32, #tpu.memory_space<vmem>>, vector<1x16x128xf32>
    %40 = vector.shape_cast %39 : vector<1x16x128xf32> to vector<16x128xf32>
    %41 = vector.shape_cast %37 : vector<16x128xf32> to vector<1x16x128xf32>
    tpu.vector_store %arg4[%38, %c0_1, %c0_2], %41 {strides = array<i32>} : memref<2x16x128xf32, #tpu.memory_space<vmem>>, vector<1x16x128xf32>,
    %c1_i32 = arith.constant 1 : i32
    %42 = arith.addi %0, %c1_i32 : i32
    %43 = arith.index_cast %42 : i32 to index
    %44 = memref.load %arg2[%43] : memref<16xi32, #tpu.memory_space<smem>>
    %c4_i32_3 = arith.constant 4 : i32
    %45 = arith.addi %c4_i32_3, %42 : i32
    %46 = arith.index_cast %45 : i32 to index
    %47 = memref.load %arg2[%46] : memref<16xi32, #tpu.memory_space<smem>>
    %c8_i32_4 = arith.constant 8 : i32
    %48 = arith.addi %c8_i32_4, %42 : i32
    %49 = arith.index_cast %48 : i32 to index
    %50 = memref.load %arg2[%49] : memref<16xi32, #tpu.memory_space<smem>>
    %c12_i32_5 = arith.constant 12 : i32
    %51 = arith.addi %c12_i32_5, %42 : i32
    %52 = arith.index_cast %51 : i32 to index
    %53 = memref.load %arg2[%52] : memref<16xi32, #tpu.memory_space<smem>>
    %54 = vector.broadcast %44 : i32 to vector<1x128xi32>
    %55 = arith.cmpi sge, %4, %54 : vector<1x128xi32>
    %56 = arith.addi %44, %47 : i32
    %57 = vector.broadcast %56 : i32 to vector<1x128xi32>
    %58 = arith.cmpi slt, %4, %57 : vector<1x128xi32>
    %59 = arith.andi %55, %58 : vector<1x128xi1>
    %60 = vector.broadcast %50 : i32 to vector<16x1xi32>
    %61 = arith.cmpi sge, %5, %60 : vector<16x1xi32>
    %62 = arith.addi %50, %53 : i32
    %63 = vector.broadcast %62 : i32 to vector<16x1xi32>
    %64 = arith.cmpi slt, %5, %63 : vector<16x1xi32>
    %65 = arith.andi %61, %64 : vector<16x1xi1>
    %66 = vector.broadcast %59 : vector<1x128xi1> to vector<16x128xi1>
    %67 = vector.broadcast %65 : vector<16x1xi1> to vector<16x128xi1>
    %68 = arith.ori %66, %67 : vector<16x128xi1>
    %69 = arith.index_cast %c1_i32 : i32 to index
    %c0_6 = arith.constant 0 : index
    %c0_7 = arith.constant 0 : index
    %70 = vector.load %arg3[%69, %c0_6, %c0_7] : memref<2x16x128xf32, #tpu.memory_space<vmem>>, vector<1x16x128xf32>
    %71 = vector.shape_cast %70 : vector<1x16x128xf32> to vector<16x128xf32>
    %72 = vector.broadcast %cst : f32 to vector<16x128xf32>
    %73 = arith.select %68, %72, %71 : vector<16x128xi1>, vector<16x128xf32>
    %74 = arith.index_cast %c1_i32 : i32 to index
    %c0_8 = arith.constant 0 : index
    %c0_9 = arith.constant 0 : index
    %75 = vector.load %arg4[%74, %c0_8, %c0_9] : memref<2x16x128xf32, #tpu.memory_space<vmem>>, vector<1x16x128xf32>
    %76 = vector.shape_cast %75 : vector<1x16x128xf32> to vector<16x128xf32>
    %77 = vector.shape_cast %73 : vector<16x128xf32> to vector<1x16x128xf32>
    tpu.vector_store %arg4[%74, %c0_8, %c0_9], %77 {strides = array<i32>} : memref<2x16x128xf32, #tpu.memory_space<vmem>>, vector<1x16x128xf32>,
    %c2_i32_10 = arith.constant 2 : i32
    return
  }
  func.func @transform_0(%arg0: i32, %arg1: i32, %arg2: memref<16xi32, #tpu.memory_space<smem>>) -> (i32, i32, i32) {
    %c0_i32 = arith.constant 0 : i32
    %c0_i32_0 = arith.constant 0 : i32
    return %arg0, %c0_i32, %arg1 : i32, i32, i32
  }
  func.func @transform_1(%arg0: i32, %arg1: i32, %arg2: memref<16xi32, #tpu.memory_space<smem>>) -> (i32, i32, i32) {
    %c0_i32 = arith.constant 0 : i32
    %c0_i32_0 = arith.constant 0 : i32
    return %arg0, %c0_i32, %arg1 : i32, i32, i32
  }
}

</mosaic_0001>

<llo_original>
// kernel: tpu_custom_call.1
$region0: #{tpu_custom_call.1}
  #allocation0 [shape = 'u32[]', space=smem, size = 0x4, offset = 0x4, fixed_abs, tag = 'smem constant byte address 0x4 - core index']
  #allocation1 [shape = 'u32[144,128]{1,0:T(1,128)}', space=vmem, size = 0x12000, scoped, tag = 'internal scratch']
  #allocation2 [shape = 's32[1]{0}', space=sflag, size = 0x4, scoped, tag = 'scoped memory for tpu_custom_call.1']
  #allocation3 [shape = 'u8[512]{0}', space=smem, size = 0x200, scoped, tag = 'prefetched SMEM operand 0']
  %s0 = inlined_call_operand.hbm [shape: s32[16], index: 0, kind: input, shape index: {}]
  %s1 = inlined_call_operand.hbm [shape: f32[4,16,128], index: 1, kind: input, shape index: {}]
  %s2 = inlined_call_operand.hbm [shape: f32[4,16,128], index: 2, kind: output, shape index: {}]
  %s3 = sld [smem:[#allocation0]]
  $region41: #{tpu_custom_call.1} parent=0
    _
  %s5 = ssub.s32 1, %s3
  %s6 = scalar_select 0, %s5, %s3
  %8 = dma.hbm_to_smem %s0, 16, [#allocation3], [#allocation2]
  %9 = dma.done [#allocation2], 16
  %10 = sfence
  $region1: #{tpu_custom_call.1} parent=0
    #allocation4 [shape = 'u8[32768]{0}', space=vmem, size = 0x8000, scoped, tag = 'input window, operand 1']
    #allocation5 [shape = 's32[2]{0}', space=sflag, size = 0x8, scoped, tag = 'scoped memory for tpu_custom_call.1']
    #allocation6 [shape = 's32[2]{0}', space=sflag, size = 0x8, scoped, tag = 'scoped memory for tpu_custom_call.1']
    #allocation7 [shape = 'u8[32768]{0}', space=vmem, size = 0x8000, scoped, tag = 'output window, operand 0']
    %11 = vsyncpa [#allocation5], 0
    %s12 = scalar_lea.sflag [#allocation5], 1
    %13 = vsyncpa %s12, 0
    %14 = vsyncpa [#allocation6], 0
    %s15 = scalar_lea.sflag [#allocation6], 1
    %16 = vsyncpa %s15, 0
    loop: start=0, step=1, limit=4
    $region2: #{tpu_custom_call.1} parent=1 // loop_pre_header
      _
    $region3: #{tpu_custom_call.1} parent=1 // loop_header
      %s18 = sphi 0, %s22
      %p19 = scmp.ge.s32.totalorder %s18, 4
      %s25 = sphi 0, %s37
      %s26 = sphi 0, %s33
      %s27 = sphi 0, %s25
      %s28 = sphi 0, %s26
      %s29 = sphi 0, %s27
      %s30 = sphi 0, %s28
      %s42 = sphi 0, %s44
      %s45 = sphi 0, %s42
      %s46 = sphi 0, %s45
      %s62 = sphi 0, %s46
      %s70 = sphi 0, %s72
      %s73 = sphi 0, %s70
      %s74 = sphi 0, %s73
      %s90 = sphi 0, %s74
    $region4: #{tpu_custom_call.1} parent=1 // loop_header_branch
      %21 = sbr.rel (%p19) target = $region8
    $region5: #{tpu_custom_call.1} parent=1 // loop_body
      %s23 = ssub.s32 %s18, 1
      %s24 = ssub.s32 %s18, 2
      %s31 = sadd.s32 1, %s26
      %p32 = scmp.ge.s32.totalorder %s31, 1
      %s33 = scalar_select %p32, 0, %s31
      %s34 = sadd.s32 1, %s25
      %s35 = scalar_select %p32, %s34, %s25
      %p36 = scmp.ge.s32.totalorder %s35, 2
      %s37 = scalar_select %p36, 0, %s35
      %s38 = ssub.s32 %s25, %s37
      %s39 = ssub.s32 %s26, %s33
      %s40 = sor.u32 %s38, %s39
      %p41 = scmp.eq.s32.totalorder %s40, 0
      %s43 = sadd.s32 %s42, 1
      %s44 = scalar_select %p41, %s42, %s43
      %p47 = pneg %p41
      %p48 = scmp.eq.s32.totalorder %s18, 1
      %p49 = por %p47, %p48
      %p50 = scmp.ne.s32.totalorder %s42, %s45
      %p51 = scmp.eq.s32.totalorder %s18, 0
      %p52 = por %p50, %p51
      %p53 = scmp.ne.s32.totalorder %s42, %s45
      %p54 = scmp.eq.s32.totalorder %s23, 1
      %p55 = por %p53, %p54
      %p56 = scmp.ne.s32.totalorder %s45, %s46
      %p57 = scmp.eq.s32.totalorder %s23, 0
      %p58 = por %p56, %p57
      %p59 = scmp.ne.s32.totalorder %s45, %s46
      %p60 = scmp.eq.s32.totalorder %s24, 1
      %p61 = por %p59, %p60
      %p63 = scmp.ne.s32.totalorder %s46, %s62
      %p64 = scmp.eq.s32.totalorder %s24, 0
      %p65 = por %p63, %p64
      %s66 = ssub.s32 %s25, %s37
      %s67 = ssub.s32 %s26, %s33
      %s68 = sor.u32 %s66, %s67
      %p69 = scmp.eq.s32.totalorder %s68, 0
      %s71 = sadd.s32 %s70, 1
      %s72 = scalar_select %p69, %s70, %s71
      %p75 = pneg %p69
      %p76 = scmp.eq.s32.totalorder %s18, 1
      %p77 = por %p75, %p76
      %p78 = scmp.ne.s32.totalorder %s70, %s73
      %p79 = scmp.eq.s32.totalorder %s18, 0
      %p80 = por %p78, %p79
      %p81 = scmp.ne.s32.totalorder %s70, %s73
      %p82 = scmp.eq.s32.totalorder %s23, 1
      %p83 = por %p81, %p82
      %p84 = scmp.ne.s32.totalorder %s73, %s74
      %p85 = scmp.eq.s32.totalorder %s23, 0
      %p86 = por %p84, %p85
      %p87 = scmp.ne.s32.totalorder %s73, %s74
      %p88 = scmp.eq.s32.totalorder %s24, 1
      %p89 = por %p87, %p88
      %p91 = scmp.ne.s32.totalorder %s74, %s90
      %p92 = scmp.eq.s32.totalorder %s24, 0
      %p93 = por %p91, %p92
      %p94 = scmp.le.s32.totalorder 1, %s18
      %p95 = scmp.lt.s32.totalorder %s18, 3
      %p96 = pnand %p94, %p95
      %p97 = pneg %p96
      // Predicated region
      $region9: #{tpu_custom_call.1} parent=5 // pred_check
        _
      $region10: #{tpu_custom_call.1} parent=5 // pred_check_branch
        %99 = sbr.rel (%p96) target = $region12
      $region11: #{tpu_custom_call.1} parent=5 // pred_region
        %s100 = ssub.s32 %s18, 1
      $region12: #{tpu_custom_call.1} parent=5 // pred_fallthru
        _
      %p101 = scmp.lt.s32.totalorder %s18, 2
      // Predicated region
      $region13: #{tpu_custom_call.1} parent=5 // pred_check
        %p102 = pneg %p101
      $region14: #{tpu_custom_call.1} parent=5 // pred_check_branch
        %104 = sbr.rel (%p102) target = $region16
      $region15: #{tpu_custom_call.1} parent=5 // pred_region
        // Predicated region
        $region17: #{tpu_custom_call.1} parent=15 // pred_check
          %p105 = pneg %p52
        $region18: #{tpu_custom_call.1} parent=15 // pred_check_branch
          %107 = sbr.rel (%p105) target = $region20
        $region19: #{tpu_custom_call.1} parent=15 // pred_region
          %s108 = sand.u32 %s42, 1
          %s109 = scalar_lea.sflag [#allocation5], %s108
          %s110 = sand.u32 %s42, 1
          %s111 = smul.addr %s110, 32
          %s112 = scalar_lea.vmem [#allocation4], %s111
          %s113 = smul.u32 2, %s25
          %s115 = ssub.s32 512, 512
          %116 = vsyncadd %s109, %s115
          %s117 = smul.addr %s113, 2
          %s118 = sadd.s32 %s26, %s117
          %s119 = smul.addr %s118, 128
          %s120 = scalar_lea.hbm %s1, %s119
          %s121 = sshll.u32 %s112, 4
          %s122 = int_to_ptr.vmem [resolvable:$true] %s121
          %127 = dma.hbm_to_vmem [thread:$0]  %s120, 512, %s122, %s109, 128, 128, 8
        $region20: #{tpu_custom_call.1} parent=15 // pred_fallthru
          _
      $region16: #{tpu_custom_call.1} parent=5 // pred_fallthru
        _
      %p128 = scmp.le.s32.totalorder 1, %s18
      %p129 = scmp.lt.s32.totalorder %s18, 3
      %p130 = pnand %p128, %p129
      %p131 = pneg %p130
      // Predicated region
      $region21: #{tpu_custom_call.1} parent=5 // pred_check
        _
      $region22: #{tpu_custom_call.1} parent=5 // pred_check_branch
        %133 = sbr.rel (%p130) target = $region24
      $region23: #{tpu_custom_call.1} parent=5 // pred_region
        %s134 = ssub.s32 %s18, 1
        %s135 = sand.u32 %s45, 1
        %s136 = scalar_lea.sflag [#allocation5], %s135
        %s137 = sand.u32 %s45, 1
        %s138 = smul.addr %s137, 32
        %s139 = scalar_lea.vmem [#allocation4], %s138
        // Predicated region
        $region25: #{tpu_custom_call.1} parent=23 // pred_check
          %p140 = pneg %p58
        $region26: #{tpu_custom_call.1} parent=23 // pred_check_branch
          %142 = sbr.rel (%p140) target = $region28
        $region27: #{tpu_custom_call.1} parent=23 // pred_region
          %143 = dma.done %s136, 512
        $region28: #{tpu_custom_call.1} parent=23 // pred_fallthru
          _
        %s144 = sand.u32 %s45, 1
        %s145 = scalar_lea.sflag [#allocation5], %s144
        %s146 = sand.u32 %s45, 1
        %s147 = smul.addr %s146, 32
        %s148 = scalar_lea.vmem [#allocation4], %s147
        %p149 = pneg %p58
        %p150 = pneg %p55
        %p151 = pneg %p86
        %p152 = pneg %p83
        %s153 = sand.u32 %s73, 1
        %s154 = scalar_lea.sflag [#allocation6], %s153
        %s155 = sand.u32 %s73, 1
        %s156 = smul.addr %s155, 32
        %s157 = scalar_lea.vmem [#allocation7], %s156
        %s158 = smul.u32 2, %s27
        %s159 = smul.u32 2, %s27
        %s160 = smul.u32 %s27, 2
        %s161 = smul.u32 %s28, 128
        %v162 = vlaneseq
        %v163 = vand.u32 %v162, 127
        %v164 = vstv %s161
        %v165 = vadd.s32 %v164, %v163
        %v166 = vlaneseq
        %v167 = vshrl.u32 %v166, 7
        %v168 = vadd.s32 %v167, 8
        %s169 = sld [smem:[#allocation3 + %s160]]
        %s170 = sadd.s32 %s160, 4
        %s171 = sld [smem:[#allocation3 + %s170]]
        %s172 = sadd.s32 %s160, 8
        %s173 = sld [smem:[#allocation3 + %s172]]
        %s174 = sadd.s32 %s160, 12
        %s175 = sld [smem:[#allocation3 + %s174]]
        %v176 = vstv %s169
        %vm177 = vcmp.ge.s32.totalorder %v165, %v176
        %s178 = sadd.s32 %s169, %s171
        %v179 = vstv %s178
        %vm180 = vcmp.lt.s32.totalorder %v165, %v179
        %vm181 = vmand %vm177, %vm180
        %v182 = vstv %s173
        %vm183 = vcmp.ge.s32.totalorder %v167, %v182
        %vm184 = vcmp.ge.s32.totalorder %v168, %v182
        %s185 = sadd.s32 %s173, %s175
        %v186 = vstv %s185
        %vm187 = vcmp.lt.s32.totalorder %v167, %v186
        %vm188 = vcmp.lt.s32.totalorder %v168, %v186
        %vm189 = vmand %vm183, %vm187
        %vm190 = vmand %vm184, %vm188
        %v191 = vsel %vm181, 1, 0
        %vm192 = vcmp.eq.s32.totalorder %v191, 1
        %v193 = vsel %vm189, 1, 0
        %v194 = vsel %vm190, 1, 0
        %vm195 = vcmp.eq.s32.totalorder %v193, 1
        %vm196 = vcmp.eq.s32.totalorder %v194, 1
        %vm197 = vmor %vm192, %vm195
        %vm198 = vmor %vm192, %vm196
        %v199 = vld [vmem:[%s139] sm:$0xff]
        %v200 = vld [vmem:[%s139 + $0x8] sm:$0xff]
        %v201 = vsel %vm197, 0.0, %v199
        %v202 = vsel %vm198, 0.0, %v200
        %203 = vst [vmem:[%s157] sm:$0xff] %v201
        %204 = vst [vmem:[%s157 + $0x8] sm:$0xff] %v202
        %s205 = sadd.s32 %s160, 1
        %s206 = sld [smem:[#allocation3 + %s205]]
        %s207 = sadd.s32 %s160, 5
        %s208 = sld [smem:[#allocation3 + %s207]]
        %s209 = sadd.s32 %s160, 9
        %s210 = sld [smem:[#allocation3 + %s209]]
        %s211 = sadd.s32 %s160, 13
        %s212 = sld [smem:[#allocation3 + %s211]]
        %v213 = vstv %s206
        %vm214 = vcmp.ge.s32.totalorder %v165, %v213
        %s215 = sadd.s32 %s206, %s208
        %v216 = vstv %s215
        %vm217 = vcmp.lt.s32.totalorder %v165, %v216
        %vm218 = vmand %vm214, %vm217
        %v219 = vstv %s210
        %vm220 = vcmp.ge.s32.totalorder %v167, %v219
        %vm221 = vcmp.ge.s32.totalorder %v168, %v219
        %s222 = sadd.s32 %s210, %s212
        %v223 = vstv %s222
        %vm224 = vcmp.lt.s32.totalorder %v167, %v223
        %vm225 = vcmp.lt.s32.totalorder %v168, %v223
        %vm226 = vmand %vm220, %vm224
        %vm227 = vmand %vm221, %vm225
        %v228 = vsel %vm218, 1, 0
        %vm229 = vcmp.eq.s32.totalorder %v228, 1
        %v230 = vsel %vm226, 1, 0
        %v231 = vsel %vm227, 1, 0
        %vm232 = vcmp.eq.s32.totalorder %v230, 1
        %vm233 = vcmp.eq.s32.totalorder %v231, 1
        %vm234 = vmor %vm229, %vm232
        %vm235 = vmor %vm229, %vm233
        %s236 = scalar_lea.vmem %s139, 16 [#allocation4]
        %v237 = vld [vmem:[%s236] sm:$0xff]
        %v238 = vld [vmem:[%s236 + $0x8] sm:$0xff]
        %v239 = vsel %vm234, 0.0, %v237
        %v240 = vsel %vm235, 0.0, %v238
        %s241 = scalar_lea.vmem %s157, 16 [#allocation7]
        %242 = vst [vmem:[%s241] sm:$0xff] %v239
        %243 = vst [vmem:[%s241 + $0x8] sm:$0xff] %v240
        %s244 = sand.u32 %s73, 1
        %s245 = scalar_lea.sflag [#allocation6], %s244
        %s246 = sand.u32 %s73, 1
        %s247 = smul.addr %s246, 32
        %s248 = scalar_lea.vmem [#allocation7], %s247
        // Predicated region
        $region29: #{tpu_custom_call.1} parent=23 // pred_check
          %p249 = pneg %p83
        $region30: #{tpu_custom_call.1} parent=23 // pred_check_branch
          %251 = sbr.rel (%p249) target = $region32
        $region31: #{tpu_custom_call.1} parent=23 // pred_region
          %s252 = smul.u32 2, %s27
          %s254 = ssub.s32 512, 512
          %255 = vsyncadd %s245, %s254
          %s256 = smul.addr %s252, 2
          %s257 = sadd.s32 %s28, %s256
          %s258 = smul.addr %s257, 128
          %s259 = scalar_lea.hbm %s2, %s258
          %s260 = sshll.u32 %s248, 4
          %s261 = int_to_ptr.vmem [resolvable:$true] %s260
          %266 = dma.vmem_to_hbm [thread:$0]  %s261, 512, %s259, %s245, 128, 128, 8
        $region32: #{tpu_custom_call.1} parent=23 // pred_fallthru
          _
      $region24: #{tpu_custom_call.1} parent=5 // pred_fallthru
        _
      %p267 = scmp.le.s32.totalorder 2, %s18
      // Predicated region
      $region33: #{tpu_custom_call.1} parent=5 // pred_check
        %p268 = pneg %p267
      $region34: #{tpu_custom_call.1} parent=5 // pred_check_branch
        %270 = sbr.rel (%p268) target = $region36
      $region35: #{tpu_custom_call.1} parent=5 // pred_region
        %s271 = ssub.s32 %s18, 2
        // Predicated region
        $region37: #{tpu_custom_call.1} parent=35 // pred_check
          %p272 = pneg %p89
        $region38: #{tpu_custom_call.1} parent=35 // pred_check_branch
          %274 = sbr.rel (%p272) target = $region40
        $region39: #{tpu_custom_call.1} parent=35 // pred_region
          %s275 = sand.u32 %s74, 1
          %s276 = scalar_lea.sflag [#allocation6], %s275
          %s277 = sand.u32 %s74, 1
          %s278 = smul.addr %s277, 32
          %s279 = scalar_lea.vmem [#allocation7], %s278
          %280 = dma.done %s276, 512
        $region40: #{tpu_custom_call.1} parent=35 // pred_fallthru
          _
      $region36: #{tpu_custom_call.1} parent=5 // pred_fallthru
        _
    $region6: #{tpu_custom_call.1} parent=1 // loop_footer
      %s22 = sadd.s32 1, %s18
    $region7: #{tpu_custom_call.1} parent=1 // loop_footer_branch
      %17 = sbr.rel target = $region3
    $region8: #{tpu_custom_call.1} parent=1 // loop_exit
      _
    %281 = vsyncpa [#allocation5], 1
    %s282 = scalar_lea.sflag [#allocation5], 1
    %283 = vsyncpa %s282, 1
    %284 = vsyncpa [#allocation6], 1
    %s285 = scalar_lea.sflag [#allocation6], 1
    %286 = vsyncpa %s285, 1

</llo_original>
